<compile_context>
chip_gen: v7x
topology: tpu7x:2x2x1
jax: 0.10.0
libtpu: 0.0.40
codegen_flags: <defaults>
</compile_context>

<pallas_src>
import functools
import math

import jax
import jax.numpy as jnp
from jax.experimental import pallas as pl
from jax.experimental.pallas import tpu as pltpu


def _round_up(x: int, m: int) -> int:
    return ((x + m - 1) // m) * m


def _linear_kernel(x_ref, w_ref, b_ref, o_ref, *, tk, resident_w):
    """One (tm, N) output tile; K reduction along grid axis 1."""
    k = pl.program_id(1)

    @pl.when(k == 0)
    def _():
        o_ref[...] = jnp.zeros_like(o_ref)

    if resident_w:
        # Full (D_pad, N) W lives in VMEM; take the current K slice.
        off = pl.multiple_of(k * tk, tk)
        w_tile = w_ref[pl.ds(off, tk), :]
    else:
        w_tile = w_ref[...]

    # Cast x tile to bf16 on the VPU (free under the DMA/MXU); f32 accumulate.
    o_ref[...] += jnp.dot(
        x_ref[...].astype(jnp.bfloat16), w_tile,
        preferred_element_type=jnp.float32,
    )

    # Bias add only on the final K step.
    @pl.when(k == pl.num_programs(1) - 1)
    def _():
        o_ref[...] += b_ref[...]


def prepare_params(w, b):
    """One-time parameter prep (outside the jitted forward).

    Casts W to bf16 (halves the dominant HBM stream) and zero-pads its
    reduction dim to a multiple of 128.  The class dim is NOT padded.
    """
    D, N = w.shape
    D_pad = _round_up(D, 128)
    w_bf16 = w.astype(jnp.bfloat16)
    if D_pad != D:
        w_bf16 = jnp.zeros((D_pad, N), jnp.bfloat16).at[:D, :].set(w_bf16)
    b_prep = b.astype(jnp.float32).reshape(1, N)
    return w_bf16, b_prep


@functools.partial(
    jax.jit, static_argnames=("tm_max", "tk_max", "w_resident_budget"))
def algorithm_forward(x_nchw, w_prep, b_prep, *, tm_max=256, tk_max=2048,
                      w_resident_budget=8 * 1024 * 1024):
    """x_nchw: [B, C, H, W] f32; w_prep: [D_pad, N] bf16; b_prep: [1, N] f32."""
    B = int(x_nchw.shape[0])
    D = math.prod(int(s) for s in x_nchw.shape[1:])
    D_pad, N = int(w_prep.shape[0]), int(w_prep.shape[1])

    # --- K tile: largest multiple of 128 dividing D_pad, capped at tk_max ---
    units = D_pad // 128
    tk = 128
    for m in range(min(tk_max // 128, units), 0, -1):
        if units % m == 0:
            tk = 128 * m
            break
    n_k = D_pad // tk

    # --- M tile: pad batch to f32 sublane (8); tm divides B_pad exactly ------
    B_pad = _round_up(B, 8)
    tm = 8
    for t in range(min(tm_max, B_pad), 7, -8):
        if B_pad % t == 0:
            tm = t
            break
    n_m = B_pad // tm

    # --- x: flatten; pad only if strictly needed (no bf16 copy, no N pad) ----
    x_flat = x_nchw.reshape(B, D).astype(jnp.float32)
    if (B_pad, D_pad) != (B, D):
        x_flat = jnp.pad(x_flat, ((0, B_pad - B), (0, D_pad - D)))

    # --- W: resident in VMEM when it fits the budget, else streamed ----------
    resident_w = (D_pad * N * 2) <= w_resident_budget
    if resident_w:
        w_spec = pl.BlockSpec((D_pad, N), lambda i, k: (0, 0))
        w_hbm_bytes = D_pad * N * 2                       # fetched once
    else:
        w_spec = pl.BlockSpec((tk, N), lambda i, k: (k, 0))
        w_hbm_bytes = n_m * D_pad * N * 2                 # re-streamed per M tile

    kernel = functools.partial(_linear_kernel, tk=tk, resident_w=resident_w)

    # --- explicit VMEM budget (double-buffered x, W, resident out, bias) -----
    vmem_need = (2 * tm * tk * 4
                 + (D_pad * N * 2 if resident_w else 2 * tk * N * 2)
                 + 2 * tm * max(N, 128) * 4
                 + 2 * max(N, 128) * 4)
    vmem_limit = min(48 * 1024 * 1024,
                     max(2 * vmem_need, 16 * 1024 * 1024))

    cost = pl.CostEstimate(
        flops=2 * B_pad * D_pad * N,
        transcendentals=0,
        bytes_accessed=4 * B_pad * D_pad + w_hbm_bytes + 4 * B_pad * N + 4 * N,
    )

    out = pl.pallas_call(
        kernel,
        out_shape=jax.ShapeDtypeStruct((B_pad, N), jnp.float32),
        grid_spec=pltpu.PrefetchScalarGridSpec(
            num_scalar_prefetch=0,
            grid=(n_m, n_k),
            in_specs=[
                pl.BlockSpec((tm, tk), lambda i, k: (i, k)),   # x tile (f32)
                w_spec,                                        # W (bf16)
                pl.BlockSpec((1, N), lambda i, k: (0, 0)),     # bias
            ],
            out_specs=pl.BlockSpec((tm, N), lambda i, k: (i, 0)),
        ),
        compiler_params=pltpu.CompilerParams(
            dimension_semantics=("parallel", "arbitrary"),
            vmem_limit_bytes=vmem_limit,
        ),
        cost_estimate=cost,
    )(x_flat, w_prep, b_prep)

    return out[:B] if B_pad != B else out


if __name__ == "__main__":
    # Small shapes consistent with an image-classification Algorithm.
    batch, channels, spatial = 2, 4, 16
    num_classes = 8
    D = channels * spatial * spatial

    key = jax.random.PRNGKey(0)
    kx, kw, kb = jax.random.split(key, 3)

    x = jax.random.normal(kx, (batch, channels, spatial, spatial),
                          dtype=jnp.float32)
    # Deterministic synthetic parameters (no checkpoint load).
    w = jax.random.normal(kw, (D, num_classes), dtype=jnp.float32) * 0.02
    b = jax.random.normal(kb, (num_classes,), dtype=jnp.float32) * 0.01

    w_prep, b_prep = prepare_params(w, b)          # one-time prep, not per call
    logits = algorithm_forward(x, w_prep, b_prep)
    jax.block_until_ready(logits)
    assert logits.shape == (batch, num_classes)

    # Reference at matching precision (bf16 operands, f32 accumulate).
    ref_bf16 = jnp.dot(
        x.reshape(batch, D).astype(jnp.bfloat16),
        w.astype(jnp.bfloat16),
        preferred_element_type=jnp.float32,
    ) + b
    assert jnp.allclose(logits, ref_bf16, atol=2e-3, rtol=2e-3)

    # Loose sanity check against the full-f32 reference.
    ref_f32 = x.reshape(batch, D) @ w + b
    assert jnp.allclose(logits, ref_f32, atol=5e-2, rtol=5e-2)

    print("KERNEL_OK")
</pallas_src>

<mosaic_0001>
module attributes {stable_mosaic.version = 11 : i64} {
  func.func @_linear_kernel(%arg0: i32, %arg1: i32, %arg2: memref<8x1024xf32, #tpu.memory_space<vmem>>, %arg3: memref<1024x8xbf16, #tpu.memory_space<vmem>>, %arg4: memref<1x8xf32, #tpu.memory_space<vmem>>, %arg5: memref<8x8xf32, #tpu.memory_space<vmem>>) attributes {dimension_semantics = [#tpu.dimension_semantics<parallel>, #tpu.dimension_semantics<arbitrary>], iteration_bounds = array<i64: 1, 1>, scalar_prefetch = 0 : i64, scratch_operands = 0 : i64, tpu.core_type = #tpu.core_type<tc>, window_params = [{transform_indices = @transform_0, window_bounds = array<i64: 8, 1024>}, {pipeline_mode = #tpu.pipeline_mode<synchronous>, transform_indices = @transform_1, window_bounds = array<i64: 1024, 8>}, {pipeline_mode = #tpu.pipeline_mode<synchronous>, transform_indices = @transform_2, window_bounds = array<i64: 1, 8>}, {transform_indices = @transform_3, window_bounds = array<i64: 8, 8>}]} {
    %c0_i32 = arith.constant 0 : i32
    %0 = arith.cmpi eq, %arg1, %c0_i32 : i32
    %1 = arith.extui %0 : i1 to i32
    %c0_i32_0 = arith.constant 0 : i32
    %2 = arith.cmpi ne, %1, %c0_i32_0 : i32
    scf.if %2 {
      %cst_9 = arith.constant 0.000000e+00 : f32
      %16 = vector.broadcast %cst_9 : f32 to vector<8x8xf32>
      %c0_10 = arith.constant 0 : index
      %c0_11 = arith.constant 0 : index
      %17 = vector.load %arg5[%c0_10, %c0_11] : memref<8x8xf32, #tpu.memory_space<vmem>>, vector<8x8xf32>
      tpu.vector_store %arg5[%c0_10, %c0_11], %16 {strides = array<i32>} : memref<8x8xf32, #tpu.memory_space<vmem>>, vector<8x8xf32>,
    } else {
    }
    %c1024_i32 = arith.constant 1024 : i32
    %3 = arith.muli %arg1, %c1024_i32 : i32
    %4 = tpu.assume_multiple %3, 1024 : i32
    %5 = arith.index_cast %4 : i32 to index
    %c0 = arith.constant 0 : index
    %6 = vector.load %arg3[%5, %c0] : memref<1024x8xbf16, #tpu.memory_space<vmem>>, vector<1024x8xbf16>
    %c0_1 = arith.constant 0 : index
    %c0_2 = arith.constant 0 : index
    %7 = vector.load %arg5[%c0_1, %c0_2] : memref<8x8xf32, #tpu.memory_space<vmem>>, vector<8x8xf32>
    %c0_3 = arith.constant 0 : index
    %c0_4 = arith.constant 0 : index
    %8 = vector.load %arg2[%c0_3, %c0_4] : memref<8x1024xf32, #tpu.memory_space<vmem>>, vector<8x1024xf32>
    %9 = arith.truncf %8 : vector<8x1024xf32> to vector<8x1024xbf16>
    %cst = arith.constant dense<0.000000e+00> : vector<8x8xf32>
    %10 = tpu.matmul %9, %6, %cst {dimension_numbers = #tpu.dot_dimension_numbers<[1], [0], [0], [1], [0, 0, 1, 1], [], []>} : vector<8x1024xbf16>, vector<1024x8xbf16>, vector<8x8xf32> -> vector<8x8xf32>
    %11 = arith.addf %7, %10 : vector<8x8xf32>
    %c0_5 = arith.constant 0 : index
    %c0_6 = arith.constant 0 : index
    %12 = vector.load %arg5[%c0_5, %c0_6] : memref<8x8xf32, #tpu.memory_space<vmem>>, vector<8x8xf32>
    tpu.vector_store %arg5[%c0_5, %c0_6], %11 {strides = array<i32>} : memref<8x8xf32, #tpu.memory_space<vmem>>, vector<8x8xf32>,
    %c0_i32_7 = arith.constant 0 : i32
    %13 = arith.cmpi eq, %arg1, %c0_i32_7 : i32
    %14 = arith.extui %13 : i1 to i32
    %c0_i32_8 = arith.constant 0 : i32
    %15 = arith.cmpi ne, %14, %c0_i32_8 : i32
    scf.if %15 {
      %c0_9 = arith.constant 0 : index
      %c0_10 = arith.constant 0 : index
      %16 = vector.load %arg5[%c0_9, %c0_10] : memref<8x8xf32, #tpu.memory_space<vmem>>, vector<8x8xf32>
      %c0_11 = arith.constant 0 : index
      %c0_12 = arith.constant 0 : index
      %17 = vector.load %arg4[%c0_11, %c0_12] : memref<1x8xf32, #tpu.memory_space<vmem>>, vector<1x8xf32>
      %18 = vector.broadcast %17 : vector<1x8xf32> to vector<8x8xf32>
      %19 = arith.addf %16, %18 : vector<8x8xf32>
      %c0_13 = arith.constant 0 : index
      %c0_14 = arith.constant 0 : index
      %20 = vector.load %arg5[%c0_13, %c0_14] : memref<8x8xf32, #tpu.memory_space<vmem>>, vector<8x8xf32>
      tpu.vector_store %arg5[%c0_13, %c0_14], %19 {strides = array<i32>} : memref<8x8xf32, #tpu.memory_space<vmem>>, vector<8x8xf32>,
    } else {
    }
    return
  }
  func.func @transform_0(%arg0: i32, %arg1: i32) -> (i32, i32) {
    %c0_i32 = arith.constant 0 : i32
    return %arg0, %arg1 : i32, i32
  }
  func.func @transform_1(%arg0: i32, %arg1: i32) -> (i32, i32) {
    %c0_i32 = arith.constant 0 : i32
    %c0_i32_0 = arith.constant 0 : i32
    %c0_i32_1 = arith.constant 0 : i32
    return %c0_i32, %c0_i32_0 : i32, i32
  }
  func.func @transform_2(%arg0: i32, %arg1: i32) -> (i32, i32) {
    %c0_i32 = arith.constant 0 : i32
    %c0_i32_0 = arith.constant 0 : i32
    %c0_i32_1 = arith.constant 0 : i32
    return %c0_i32, %c0_i32_0 : i32, i32
  }
  func.func @transform_3(%arg0: i32, %arg1: i32) -> (i32, i32) {
    %c0_i32 = arith.constant 0 : i32
    %c0_i32_0 = arith.constant 0 : i32
    return %arg0, %c0_i32 : i32, i32
  }
}

</mosaic_0001>

<llo_original>
// kernel: algorithm_forward.1
$region0: #{algorithm_forward.1}
  #allocation0 [shape = 'u32[]', space=smem, size = 0x4, offset = 0x4, fixed_abs, tag = 'smem constant byte address 0x4 - core index']
  #allocation1 [shape = 'u32[144,128]{1,0:T(1,128)}', space=vmem, size = 0x12000, scoped, tag = 'internal scratch']
  %s0 = inlined_call_operand.vmem [shape: f32[8,1024], index: 0, kind: input, shape index: {}]
  %s1 = inlined_call_operand.vmem [shape: bf16[1024,8], index: 1, kind: input, shape index: {}]
  %s2 = inlined_call_operand.vmem [shape: f32[1,8], index: 2, kind: input, shape index: {}]
  %s3 = inlined_call_operand.vmem [shape: f32[8,8], index: 3, kind: output, shape index: {}]
  %s4 = sld [smem:[#allocation0]]
  $region30: #{algorithm_forward.1} parent=0
    _
  %s6 = ssub.s32 1, %s4
  %s7 = scalar_select 0, %s6, %s4
  // Predicated region
  $region2: #{algorithm_forward.1} parent=0 // pred_check
    _
  $region3: #{algorithm_forward.1} parent=0 // pred_check_branch
    %9 = sbr.rel (0) target = $region5
  $region4: #{algorithm_forward.1} parent=0 // pred_region
    _
  $region5: #{algorithm_forward.1} parent=0 // pred_fallthru
    _
  // Predicated region
  $region6: #{algorithm_forward.1} parent=0 // pred_check
    _
  $region7: #{algorithm_forward.1} parent=0 // pred_check_branch
    %11 = sbr.rel (0) target = $region9
  $region8: #{algorithm_forward.1} parent=0 // pred_region
    _
  $region9: #{algorithm_forward.1} parent=0 // pred_fallthru
    _
  // Predicated region
  $region10: #{algorithm_forward.1} parent=0 // pred_check
    _
  $region11: #{algorithm_forward.1} parent=0 // pred_check_branch
    %13 = sbr.rel (0) target = $region13
  $region12: #{algorithm_forward.1} parent=0 // pred_region
    _
  $region13: #{algorithm_forward.1} parent=0 // pred_fallthru
    _
  %p15 = scmp.eq.s32.totalorder 0, 0
  // Predicated region
  $region14: #{algorithm_forward.1} parent=0 // pred_check
    %p16 = pneg %p15
  $region15: #{algorithm_forward.1} parent=0 // pred_check_branch
    %18 = sbr.rel (%p16) target = $region17
  $region16: #{algorithm_forward.1} parent=0 // pred_region
    %vm19 = vcmask 64512
    %20 = vst.msk [vmem:[%s3] sm:$0xff] %vm19, 0.0
  $region17: #{algorithm_forward.1} parent=0 // pred_fallthru
    _
  %s21 = smul.u32 0, 1024
  %s22 = sshra.s32 %s21, 3
  %s23 = sand.u32 %s21, 7
  %s24 = smul.addr %s22, 4
  %s25 = scalar_lea.vmem %s1, %s24
  %v26 = vld [vmem:[%s25] sm:$0xf]
  %v27 = vld [vmem:[%s25 + $0x4] sm:$0xf]
  %v28 = vld [vmem:[%s25 + $0x8] sm:$0xf]
  %v29 = vld [vmem:[%s25 + $0xc] sm:$0xf]
  %v30 = vld [vmem:[%s25 + $0x10] sm:$0xf]
  %v31 = vld [vmem:[%s25 + $0x14] sm:$0xf]
  %v32 = vld [vmem:[%s25 + $0x18] sm:$0xf]
  %v33 = vld [vmem:[%s25 + $0x1c] sm:$0xf]
  %v34 = vld [vmem:[%s25 + $0x20] sm:$0xf]
  %v35 = vld [vmem:[%s25 + $0x24] sm:$0xf]
  %v36 = vld [vmem:[%s25 + $0x28] sm:$0xf]
  %v37 = vld [vmem:[%s25 + $0x2c] sm:$0xf]
  %v38 = vld [vmem:[%s25 + $0x30] sm:$0xf]
  %v39 = vld [vmem:[%s25 + $0x34] sm:$0xf]
  %v40 = vld [vmem:[%s25 + $0x38] sm:$0xf]
  %v41 = vld [vmem:[%s25 + $0x3c] sm:$0xf]
  %v42 = vld [vmem:[%s25 + $0x40] sm:$0xf]
  %v43 = vld [vmem:[%s25 + $0x44] sm:$0xf]
  %v44 = vld [vmem:[%s25 + $0x48] sm:$0xf]
  %v45 = vld [vmem:[%s25 + $0x4c] sm:$0xf]
  %v46 = vld [vmem:[%s25 + $0x50] sm:$0xf]
  %v47 = vld [vmem:[%s25 + $0x54] sm:$0xf]
  %v48 = vld [vmem:[%s25 + $0x58] sm:$0xf]
  %v49 = vld [vmem:[%s25 + $0x5c] sm:$0xf]
  %v50 = vld [vmem:[%s25 + $0x60] sm:$0xf]
  %v51 = vld [vmem:[%s25 + $0x64] sm:$0xf]
  %v52 = vld [vmem:[%s25 + $0x68] sm:$0xf]
  %v53 = vld [vmem:[%s25 + $0x6c] sm:$0xf]
  %v54 = vld [vmem:[%s25 + $0x70] sm:$0xf]
  %v55 = vld [vmem:[%s25 + $0x74] sm:$0xf]
  %v56 = vld [vmem:[%s25 + $0x78] sm:$0xf]
  %v57 = vld [vmem:[%s25 + $0x7c] sm:$0xf]
  %v58 = vld [vmem:[%s25 + $0x80] sm:$0xf]
  %v59 = vld [vmem:[%s25 + $0x84] sm:$0xf]
  %v60 = vld [vmem:[%s25 + $0x88] sm:$0xf]
  %v61 = vld [vmem:[%s25 + $0x8c] sm:$0xf]
  %v62 = vld [vmem:[%s25 + $0x90] sm:$0xf]
  %v63 = vld [vmem:[%s25 + $0x94] sm:$0xf]
  %v64 = vld [vmem:[%s25 + $0x98] sm:$0xf]
  %v65 = vld [vmem:[%s25 + $0x9c] sm:$0xf]
  %v66 = vld [vmem:[%s25 + $0xa0] sm:$0xf]
  %v67 = vld [vmem:[%s25 + $0xa4] sm:$0xf]
  %v68 = vld [vmem:[%s25 + $0xa8] sm:$0xf]
  %v69 = vld [vmem:[%s25 + $0xac] sm:$0xf]
  %v70 = vld [vmem:[%s25 + $0xb0] sm:$0xf]
  %v71 = vld [vmem:[%s25 + $0xb4] sm:$0xf]
  %v72 = vld [vmem:[%s25 + $0xb8] sm:$0xf]
  %v73 = vld [vmem:[%s25 + $0xbc] sm:$0xf]
  %v74 = vld [vmem:[%s25 + $0xc0] sm:$0xf]
  %v75 = vld [vmem:[%s25 + $0xc4] sm:$0xf]
  %v76 = vld [vmem:[%s25 + $0xc8] sm:$0xf]
  %v77 = vld [vmem:[%s25 + $0xcc] sm:$0xf]
  %v78 = vld [vmem:[%s25 + $0xd0] sm:$0xf]
  %v79 = vld [vmem:[%s25 + $0xd4] sm:$0xf]
  %v80 = vld [vmem:[%s25 + $0xd8] sm:$0xf]
  %v81 = vld [vmem:[%s25 + $0xdc] sm:$0xf]
  %v82 = vld [vmem:[%s25 + $0xe0] sm:$0xf]
  %v83 = vld [vmem:[%s25 + $0xe4] sm:$0xf]
  %v84 = vld [vmem:[%s25 + $0xe8] sm:$0xf]
  %v85 = vld [vmem:[%s25 + $0xec] sm:$0xf]
  %v86 = vld [vmem:[%s25 + $0xf0] sm:$0xf]
  %v87 = vld [vmem:[%s25 + $0xf4] sm:$0xf]
  %v88 = vld [vmem:[%s25 + $0xf8] sm:$0xf]
  %v89 = vld [vmem:[%s25 + $0xfc] sm:$0xf]
  %v90 = vld [vmem:[%s25 + $0x100] sm:$0xf]
  %v91 = vld [vmem:[%s25 + $0x104] sm:$0xf]
  %v92 = vld [vmem:[%s25 + $0x108] sm:$0xf]
  %v93 = vld [vmem:[%s25 + $0x10c] sm:$0xf]
  %v94 = vld [vmem:[%s25 + $0x110] sm:$0xf]
  %v95 = vld [vmem:[%s25 + $0x114] sm:$0xf]
  %v96 = vld [vmem:[%s25 + $0x118] sm:$0xf]
  %v97 = vld [vmem:[%s25 + $0x11c] sm:$0xf]
  %v98 = vld [vmem:[%s25 + $0x120] sm:$0xf]
  %v99 = vld [vmem:[%s25 + $0x124] sm:$0xf]
  %v100 = vld [vmem:[%s25 + $0x128] sm:$0xf]
  %v101 = vld [vmem:[%s25 + $0x12c] sm:$0xf]
  %v102 = vld [vmem:[%s25 + $0x130] sm:$0xf]
  %v103 = vld [vmem:[%s25 + $0x134] sm:$0xf]
  %v104 = vld [vmem:[%s25 + $0x138] sm:$0xf]
  %v105 = vld [vmem:[%s25 + $0x13c] sm:$0xf]
  %v106 = vld [vmem:[%s25 + $0x140] sm:$0xf]
  %v107 = vld [vmem:[%s25 + $0x144] sm:$0xf]
  %v108 = vld [vmem:[%s25 + $0x148] sm:$0xf]
  %v109 = vld [vmem:[%s25 + $0x14c] sm:$0xf]
  %v110 = vld [vmem:[%s25 + $0x150] sm:$0xf]
  %v111 = vld [vmem:[%s25 + $0x154] sm:$0xf]
  %v112 = vld [vmem:[%s25 + $0x158] sm:$0xf]
  %v113 = vld [vmem:[%s25 + $0x15c] sm:$0xf]
  %v114 = vld [vmem:[%s25 + $0x160] sm:$0xf]
  %v115 = vld [vmem:[%s25 + $0x164] sm:$0xf]
  %v116 = vld [vmem:[%s25 + $0x168] sm:$0xf]
  %v117 = vld [vmem:[%s25 + $0x16c] sm:$0xf]
  %v118 = vld [vmem:[%s25 + $0x170] sm:$0xf]
  %v119 = vld [vmem:[%s25 + $0x174] sm:$0xf]
  %v120 = vld [vmem:[%s25 + $0x178] sm:$0xf]
  %v121 = vld [vmem:[%s25 + $0x17c] sm:$0xf]
  %v122 = vld [vmem:[%s25 + $0x180] sm:$0xf]
  %v123 = vld [vmem:[%s25 + $0x184] sm:$0xf]
  %v124 = vld [vmem:[%s25 + $0x188] sm:$0xf]
  %v125 = vld [vmem:[%s25 + $0x18c] sm:$0xf]
  %v126 = vld [vmem:[%s25 + $0x190] sm:$0xf]
  %v127 = vld [vmem:[%s25 + $0x194] sm:$0xf]
  %v128 = vld [vmem:[%s25 + $0x198] sm:$0xf]
  %v129 = vld [vmem:[%s25 + $0x19c] sm:$0xf]
  %v130 = vld [vmem:[%s25 + $0x1a0] sm:$0xf]
  %v131 = vld [vmem:[%s25 + $0x1a4] sm:$0xf]
  %v132 = vld [vmem:[%s25 + $0x1a8] sm:$0xf]
  %v133 = vld [vmem:[%s25 + $0x1ac] sm:$0xf]
  %v134 = vld [vmem:[%s25 + $0x1b0] sm:$0xf]
  %v135 = vld [vmem:[%s25 + $0x1b4] sm:$0xf]
  %v136 = vld [vmem:[%s25 + $0x1b8] sm:$0xf]
  %v137 = vld [vmem:[%s25 + $0x1bc] sm:$0xf]
  %v138 = vld [vmem:[%s25 + $0x1c0] sm:$0xf]
  %v139 = vld [vmem:[%s25 + $0x1c4] sm:$0xf]
  %v140 = vld [vmem:[%s25 + $0x1c8] sm:$0xf]
  %v141 = vld [vmem:[%s25 + $0x1cc] sm:$0xf]
  %v142 = vld [vmem:[%s25 + $0x1d0] sm:$0xf]
  %v143 = vld [vmem:[%s25 + $0x1d4] sm:$0xf]
  %v144 = vld [vmem:[%s25 + $0x1d8] sm:$0xf]
  %v145 = vld [vmem:[%s25 + $0x1dc] sm:$0xf]
  %v146 = vld [vmem:[%s25 + $0x1e0] sm:$0xf]
  %v147 = vld [vmem:[%s25 + $0x1e4] sm:$0xf]
  %v148 = vld [vmem:[%s25 + $0x1e8] sm:$0xf]
  %v149 = vld [vmem:[%s25 + $0x1ec] sm:$0xf]
  %v150 = vld [vmem:[%s25 + $0x1f0] sm:$0xf]
  %v151 = vld [vmem:[%s25 + $0x1f4] sm:$0xf]
  %v152 = vld [vmem:[%s25 + $0x1f8] sm:$0xf]
  %v153 = vld [vmem:[%s25 + $0x1fc] sm:$0xf]
  %v154 = vld [vmem:[%s3] sm:$0xff]
  %v155 = vld [vmem:[%s0] sm:$0xff]
  %v156 = vld [vmem:[%s0 + $0x8] sm:$0xff]
  %v157 = vld [vmem:[%s0 + $0x10] sm:$0xff]
  %v158 = vld [vmem:[%s0 + $0x18] sm:$0xff]
  %v159 = vld [vmem:[%s0 + $0x20] sm:$0xff]
  %v160 = vld [vmem:[%s0 + $0x28] sm:$0xff]
  %v161 = vld [vmem:[%s0 + $0x30] sm:$0xff]
  %v162 = vld [vmem:[%s0 + $0x38] sm:$0xff]
  %v163 = vpack.c.bf16 %v155, %v155
  %v164 = vpack.c.bf16 %v156, %v156
  %v165 = vpack.c.bf16 %v157, %v157
  %v166 = vpack.c.bf16 %v158, %v158
  %v167 = vpack.c.bf16 %v159, %v159
  %v168 = vpack.c.bf16 %v160, %v160
  %v169 = vpack.c.bf16 %v161, %v161
  %v170 = vpack.c.bf16 %v162, %v162
  %v299 = vunpack.c.l.b16 %v26
  %v300 = vunpack.c.l.b16 %v27
  %v301 = vunpack.c.l.b16 %v28
  %v302 = vunpack.c.l.b16 %v29
  %v303 = vunpack.c.l.b16 %v30
  %v304 = vunpack.c.l.b16 %v31
  %v305 = vunpack.c.l.b16 %v32
  %v306 = vunpack.c.l.b16 %v33
  %v307 = vunpack.c.l.b16 %v34
  %v308 = vunpack.c.l.b16 %v35
  %v309 = vunpack.c.l.b16 %v36
  %v310 = vunpack.c.l.b16 %v37
  %v311 = vunpack.c.l.b16 %v38
  %v312 = vunpack.c.l.b16 %v39
  %v313 = vunpack.c.l.b16 %v40
  %v314 = vunpack.c.l.b16 %v41
  %v315 = vunpack.c.l.b16 %v42
  %v316 = vunpack.c.l.b16 %v43
  %v317 = vunpack.c.l.b16 %v44
  %v318 = vunpack.c.l.b16 %v45
  %v319 = vunpack.c.l.b16 %v46
  %v320 = vunpack.c.l.b16 %v47
  %v321 = vunpack.c.l.b16 %v48
  %v322 = vunpack.c.l.b16 %v49
  %v323 = vunpack.c.l.b16 %v50
  %v324 = vunpack.c.l.b16 %v51
  %v325 = vunpack.c.l.b16 %v52
  %v326 = vunpack.c.l.b16 %v53
  %v327 = vunpack.c.l.b16 %v54
  %v328 = vunpack.c.l.b16 %v55
  %v329 = vunpack.c.l.b16 %v56
  %v330 = vunpack.c.l.b16 %v57
  %v331 = vunpack.c.l.b16 %v58
  %v332 = vunpack.c.l.b16 %v59
  %v333 = vunpack.c.l.b16 %v60
  %v334 = vunpack.c.l.b16 %v61
  %v335 = vunpack.c.l.b16 %v62
  %v336 = vunpack.c.l.b16 %v63
  %v337 = vunpack.c.l.b16 %v64
  %v338 = vunpack.c.l.b16 %v65
  %v339 = vunpack.c.l.b16 %v66
  %v340 = vunpack.c.l.b16 %v67
  %v341 = vunpack.c.l.b16 %v68
  %v342 = vunpack.c.l.b16 %v69
  %v343 = vunpack.c.l.b16 %v70
  %v344 = vunpack.c.l.b16 %v71
  %v345 = vunpack.c.l.b16 %v72
  %v346 = vunpack.c.l.b16 %v73
  %v347 = vunpack.c.l.b16 %v74
  %v348 = vunpack.c.l.b16 %v75
  %v349 = vunpack.c.l.b16 %v76
  %v350 = vunpack.c.l.b16 %v77
  %v351 = vunpack.c.l.b16 %v78
  %v352 = vunpack.c.l.b16 %v79
  %v353 = vunpack.c.l.b16 %v80
  %v354 = vunpack.c.l.b16 %v81
  %v355 = vunpack.c.l.b16 %v82
  %v356 = vunpack.c.l.b16 %v83
  %v357 = vunpack.c.l.b16 %v84
  %v358 = vunpack.c.l.b16 %v85
  %v359 = vunpack.c.l.b16 %v86
  %v360 = vunpack.c.l.b16 %v87
  %v361 = vunpack.c.l.b16 %v88
  %v362 = vunpack.c.l.b16 %v89
  %v363 = vunpack.c.l.b16 %v90
  %v364 = vunpack.c.l.b16 %v91
  %v365 = vunpack.c.l.b16 %v92
  %v366 = vunpack.c.l.b16 %v93
  %v367 = vunpack.c.l.b16 %v94
  %v368 = vunpack.c.l.b16 %v95
  %v369 = vunpack.c.l.b16 %v96
  %v370 = vunpack.c.l.b16 %v97
  %v371 = vunpack.c.l.b16 %v98
  %v372 = vunpack.c.l.b16 %v99
  %v373 = vunpack.c.l.b16 %v100
  %v374 = vunpack.c.l.b16 %v101
  %v375 = vunpack.c.l.b16 %v102
  %v376 = vunpack.c.l.b16 %v103
  %v377 = vunpack.c.l.b16 %v104
  %v378 = vunpack.c.l.b16 %v105
  %v379 = vunpack.c.l.b16 %v106
  %v380 = vunpack.c.l.b16 %v107
  %v381 = vunpack.c.l.b16 %v108
  %v382 = vunpack.c.l.b16 %v109
  %v383 = vunpack.c.l.b16 %v110
  %v384 = vunpack.c.l.b16 %v111
  %v385 = vunpack.c.l.b16 %v112
  %v386 = vunpack.c.l.b16 %v113
  %v387 = vunpack.c.l.b16 %v114
  %v388 = vunpack.c.l.b16 %v115
  %v389 = vunpack.c.l.b16 %v116
  %v390 = vunpack.c.l.b16 %v117
  %v391 = vunpack.c.l.b16 %v118
  %v392 = vunpack.c.l.b16 %v119
  %v393 = vunpack.c.l.b16 %v120
  %v394 = vunpack.c.l.b16 %v121
  %v395 = vunpack.c.l.b16 %v122
  %v396 = vunpack.c.l.b16 %v123
  %v397 = vunpack.c.l.b16 %v124
  %v398 = vunpack.c.l.b16 %v125
  %v399 = vunpack.c.l.b16 %v126
  %v400 = vunpack.c.l.b16 %v127
  %v401 = vunpack.c.l.b16 %v128
  %v402 = vunpack.c.l.b16 %v129
  %v403 = vunpack.c.l.b16 %v130
  %v404 = vunpack.c.l.b16 %v131
  %v405 = vunpack.c.l.b16 %v132
  %v406 = vunpack.c.l.b16 %v133
  %v407 = vunpack.c.l.b16 %v134
  %v408 = vunpack.c.l.b16 %v135
  %v409 = vunpack.c.l.b16 %v136
  %v410 = vunpack.c.l.b16 %v137
  %v411 = vunpack.c.l.b16 %v138
  %v412 = vunpack.c.l.b16 %v139
  %v413 = vunpack.c.l.b16 %v140
  %v414 = vunpack.c.l.b16 %v141
  %v415 = vunpack.c.l.b16 %v142
  %v416 = vunpack.c.l.b16 %v143
  %v417 = vunpack.c.l.b16 %v144
  %v418 = vunpack.c.l.b16 %v145
  %v419 = vunpack.c.l.b16 %v146
  %v420 = vunpack.c.l.b16 %v147
  %v421 = vunpack.c.l.b16 %v148
  %v422 = vunpack.c.l.b16 %v149
  %v423 = vunpack.c.l.b16 %v150
  %v424 = vunpack.c.l.b16 %v151
  %v425 = vunpack.c.l.b16 %v152
  %v426 = vunpack.c.l.b16 %v153
  %v427 = vpack.c.b16 %v300, %v299
  %v428 = vpack.c.b16 %v302, %v301
  %v429 = vpack.c.b16 %v304, %v303
  %v430 = vpack.c.b16 %v306, %v305
  %v431 = vpack.c.b16 %v308, %v307
  %v432 = vpack.c.b16 %v310, %v309
  %v433 = vpack.c.b16 %v312, %v311
  %v434 = vpack.c.b16 %v314, %v313
  %v435 = vpack.c.b16 %v316, %v315
  %v436 = vpack.c.b16 %v318, %v317
  %v437 = vpack.c.b16 %v320, %v319
  %v438 = vpack.c.b16 %v322, %v321
  %v439 = vpack.c.b16 %v324, %v323
  %v440 = vpack.c.b16 %v326, %v325
  %v441 = vpack.c.b16 %v328, %v327
  %v442 = vpack.c.b16 %v330, %v329
  %v443 = vpack.c.b16 %v332, %v331
  %v444 = vpack.c.b16 %v334, %v333
  %v445 = vpack.c.b16 %v336, %v335
  %v446 = vpack.c.b16 %v338, %v337
  %v447 = vpack.c.b16 %v340, %v339
  %v448 = vpack.c.b16 %v342, %v341
  %v449 = vpack.c.b16 %v344, %v343
  %v450 = vpack.c.b16 %v346, %v345
  %v451 = vpack.c.b16 %v348, %v347
  %v452 = vpack.c.b16 %v350, %v349
  %v453 = vpack.c.b16 %v352, %v351
  %v454 = vpack.c.b16 %v354, %v353
  %v455 = vpack.c.b16 %v356, %v355
  %v456 = vpack.c.b16 %v358, %v357
  %v457 = vpack.c.b16 %v360, %v359
  %v458 = vpack.c.b16 %v362, %v361
  %v459 = vpack.c.b16 %v364, %v363
  %v460 = vpack.c.b16 %v366, %v365
  %v461 = vpack.c.b16 %v368, %v367
  %v462 = vpack.c.b16 %v370, %v369
  %v463 = vpack.c.b16 %v372, %v371
  %v464 = vpack.c.b16 %v374, %v373
  %v465 = vpack.c.b16 %v376, %v375
  %v466 = vpack.c.b16 %v378, %v377
  %v467 = vpack.c.b16 %v380, %v379
  %v468 = vpack.c.b16 %v382, %v381
  %v469 = vpack.c.b16 %v384, %v383
  %v470 = vpack.c.b16 %v386, %v385
  %v471 = vpack.c.b16 %v388, %v387
  %v472 = vpack.c.b16 %v390, %v389
  %v473 = vpack.c.b16 %v392, %v391
  %v474 = vpack.c.b16 %v394, %v393
  %v475 = vpack.c.b16 %v396, %v395
  %v476 = vpack.c.b16 %v398, %v397
  %v477 = vpack.c.b16 %v400, %v399
  %v478 = vpack.c.b16 %v402, %v401
  %v479 = vpack.c.b16 %v404, %v403
  %v480 = vpack.c.b16 %v406, %v405
  %v481 = vpack.c.b16 %v408, %v407
  %v482 = vpack.c.b16 %v410, %v409
  %v483 = vpack.c.b16 %v412, %v411
  %v484 = vpack.c.b16 %v414, %v413
  %v485 = vpack.c.b16 %v416, %v415
  %v486 = vpack.c.b16 %v418, %v417
  %v487 = vpack.c.b16 %v420, %v419
  %v488 = vpack.c.b16 %v422, %v421
  %v489 = vpack.c.b16 %v424, %v423
  %v490 = vpack.c.b16 %v426, %v425
  %555 = vmatprep.subr.bf16.mxu0 0
  %556 = vmatpush1.bf16.msra.mxu0 %v427
  %557 = vmatprep.subr.bf16.mxu0 0
  %558 = vmatpush1.bf16.msra.mxu0 %v428
  %559 = vmatprep.subr.bf16.mxu0 0
  %560 = vmatpush1.bf16.msra.mxu0 %v429
  %561 = vmatprep.subr.bf16.mxu0 0
  %562 = vmatpush1.bf16.msra.mxu0 %v430
  %563 = vmatprep.subr.bf16.mxu0 0
  %564 = vmatpush1.bf16.msra.mxu0 %v431
  %565 = vmatprep.subr.bf16.mxu0 0
  %566 = vmatpush1.bf16.msra.mxu0 %v432
  %567 = vmatprep.subr.bf16.mxu0 0
  %568 = vmatpush1.bf16.msra.mxu0 %v433
  %569 = vmatprep.subr.bf16.mxu0 0
  %570 = vmatpush1.bf16.msra.mxu0 %v434
  %571 = vmatprep.subr.bf16.mxu0 0
  %572 = vmatpush1.bf16.msra.mxu0 %v435
  %573 = vmatprep.subr.bf16.mxu0 0
  %574 = vmatpush1.bf16.msra.mxu0 %v436
  %575 = vmatprep.subr.bf16.mxu0 0
  %576 = vmatpush1.bf16.msra.mxu0 %v437
  %577 = vmatprep.subr.bf16.mxu0 0
  %578 = vmatpush1.bf16.msra.mxu0 %v438
  %579 = vmatprep.subr.bf16.mxu0 0
  %580 = vmatpush1.bf16.msra.mxu0 %v439
  %581 = vmatprep.subr.bf16.mxu0 0
  %582 = vmatpush1.bf16.msra.mxu0 %v440
  %583 = vmatprep.subr.bf16.mxu0 0
  %584 = vmatpush1.bf16.msra.mxu0 %v441
  %585 = vmatprep.subr.bf16.mxu0 0
  %586 = vmatpush1.bf16.msra.mxu0 %v442
  %587 = vmatprep.mubr.bf16.mxu0 %v164
  %588 = vmatmul.mubr.bf16.gmra.mrb[0].mxu0 %v163
  %v589 = vpop.f32.mrb[0].mxu0
  %v590 = vadd.f32 0.0, %v589
  %v591 = vpop.f32.mrb[0].mxu0
  %v592 = vpop.f32.mrb[0].mxu0
  %v593 = vpop.f32.mrb[0].mxu0
  %594 = vdwg.mxu0
  %595 = vmatprep.subr.bf16.mxu0 0
  %596 = vmatpush1.bf16.msra.mxu0 %v443
  %597 = vmatprep.subr.bf16.mxu0 0
  %598 = vmatpush1.bf16.msra.mxu0 %v444
  %599 = vmatprep.subr.bf16.mxu0 0
  %600 = vmatpush1.bf16.msra.mxu0 %v445
  %601 = vmatprep.subr.bf16.mxu0 0
  %602 = vmatpush1.bf16.msra.mxu0 %v446
  %603 = vmatprep.subr.bf16.mxu0 0
  %604 = vmatpush1.bf16.msra.mxu0 %v447
  %605 = vmatprep.subr.bf16.mxu0 0
  %606 = vmatpush1.bf16.msra.mxu0 %v448
  %607 = vmatprep.subr.bf16.mxu0 0
  %608 = vmatpush1.bf16.msra.mxu0 %v449
  %609 = vmatprep.subr.bf16.mxu0 0
  %610 = vmatpush1.bf16.msra.mxu0 %v450
  %611 = vmatprep.subr.bf16.mxu0 0
  %612 = vmatpush1.bf16.msra.mxu0 %v451
  %613 = vmatprep.subr.bf16.mxu0 0
  %614 = vmatpush1.bf16.msra.mxu0 %v452
  %615 = vmatprep.subr.bf16.mxu0 0
  %616 = vmatpush1.bf16.msra.mxu0 %v453
  %617 = vmatprep.subr.bf16.mxu0 0
  %618 = vmatpush1.bf16.msra.mxu0 %v454
  %619 = vmatprep.subr.bf16.mxu0 0
  %620 = vmatpush1.bf16.msra.mxu0 %v455
  %621 = vmatprep.subr.bf16.mxu0 0
  %622 = vmatpush1.bf16.msra.mxu0 %v456
  %623 = vmatprep.subr.bf16.mxu0 0
  %624 = vmatpush1.bf16.msra.mxu0 %v457
  %625 = vmatprep.subr.bf16.mxu0 0
  %626 = vmatpush1.bf16.msra.mxu0 %v458
  %627 = vmatprep.mubr.bf16.mxu0 %v166
  %628 = vmatmul.mubr.bf16.gmra.mrb[0].mxu0 %v165
  %v629 = vpop.f32.mrb[0].mxu0
  %v630 = vadd.f32 %v590, %v629
  %v631 = vpop.f32.mrb[0].mxu0
  %v632 = vpop.f32.mrb[0].mxu0
  %v633 = vpop.f32.mrb[0].mxu0
  %634 = vdwg.mxu0
  %635 = vmatprep.subr.bf16.mxu0 0
  %636 = vmatpush1.bf16.msra.mxu0 %v459
  %637 = vmatprep.subr.bf16.mxu0 0
  %638 = vmatpush1.bf16.msra.mxu0 %v460
  %639 = vmatprep.subr.bf16.mxu0 0
  %640 = vmatpush1.bf16.msra.mxu0 %v461
  %641 = vmatprep.subr.bf16.mxu0 0
  %642 = vmatpush1.bf16.msra.mxu0 %v462
  %643 = vmatprep.subr.bf16.mxu0 0
  %644 = vmatpush1.bf16.msra.mxu0 %v463
  %645 = vmatprep.subr.bf16.mxu0 0
  %646 = vmatpush1.bf16.msra.mxu0 %v464
  %647 = vmatprep.subr.bf16.mxu0 0
  %648 = vmatpush1.bf16.msra.mxu0 %v465
  %649 = vmatprep.subr.bf16.mxu0 0
  %650 = vmatpush1.bf16.msra.mxu0 %v466
  %651 = vmatprep.subr.bf16.mxu0 0
  %652 = vmatpush1.bf16.msra.mxu0 %v467
  %653 = vmatprep.subr.bf16.mxu0 0
  %654 = vmatpush1.bf16.msra.mxu0 %v468
  %655 = vmatprep.subr.bf16.mxu0 0
  %656 = vmatpush1.bf16.msra.mxu0 %v469
  %657 = vmatprep.subr.bf16.mxu0 0
  %658 = vmatpush1.bf16.msra.mxu0 %v470
  %659 = vmatprep.subr.bf16.mxu0 0
  %660 = vmatpush1.bf16.msra.mxu0 %v471
  %661 = vmatprep.subr.bf16.mxu0 0
  %662 = vmatpush1.bf16.msra.mxu0 %v472
  %663 = vmatprep.subr.bf16.mxu0 0
  %664 = vmatpush1.bf16.msra.mxu0 %v473
  %665 = vmatprep.subr.bf16.mxu0 0
  %666 = vmatpush1.bf16.msra.mxu0 %v474
  %667 = vmatprep.mubr.bf16.mxu0 %v168
  %668 = vmatmul.mubr.bf16.gmra.mrb[0].mxu0 %v167
  %v669 = vpop.f32.mrb[0].mxu0
  %v670 = vadd.f32 %v630, %v669
  %v671 = vpop.f32.mrb[0].mxu0
  %v672 = vpop.f32.mrb[0].mxu0
  %v673 = vpop.f32.mrb[0].mxu0
  %674 = vdwg.mxu0
  %675 = vmatprep.subr.bf16.mxu0 0
  %676 = vmatpush1.bf16.msra.mxu0 %v475
  %677 = vmatprep.subr.bf16.mxu0 0
  %678 = vmatpush1.bf16.msra.mxu0 %v476
  %679 = vmatprep.subr.bf16.mxu0 0
  %680 = vmatpush1.bf16.msra.mxu0 %v477
  %681 = vmatprep.subr.bf16.mxu0 0
  %682 = vmatpush1.bf16.msra.mxu0 %v478
  %683 = vmatprep.subr.bf16.mxu0 0
  %684 = vmatpush1.bf16.msra.mxu0 %v479
  %685 = vmatprep.subr.bf16.mxu0 0
  %686 = vmatpush1.bf16.msra.mxu0 %v480
  %687 = vmatprep.subr.bf16.mxu0 0
  %688 = vmatpush1.bf16.msra.mxu0 %v481
  %689 = vmatprep.subr.bf16.mxu0 0
  %690 = vmatpush1.bf16.msra.mxu0 %v482
  %691 = vmatprep.subr.bf16.mxu0 0
  %692 = vmatpush1.bf16.msra.mxu0 %v483
  %693 = vmatprep.subr.bf16.mxu0 0
  %694 = vmatpush1.bf16.msra.mxu0 %v484
  %695 = vmatprep.subr.bf16.mxu0 0
  %696 = vmatpush1.bf16.msra.mxu0 %v485
  %697 = vmatprep.subr.bf16.mxu0 0
  %698 = vmatpush1.bf16.msra.mxu0 %v486
  %699 = vmatprep.subr.bf16.mxu0 0
  %700 = vmatpush1.bf16.msra.mxu0 %v487
  %701 = vmatprep.subr.bf16.mxu0 0
  %702 = vmatpush1.bf16.msra.mxu0 %v488
  %703 = vmatprep.subr.bf16.mxu0 0
  %704 = vmatpush1.bf16.msra.mxu0 %v489
  %705 = vmatprep.subr.bf16.mxu0 0
  %706 = vmatpush1.bf16.msra.mxu0 %v490
  %707 = vmatprep.mubr.bf16.mxu0 %v170
  %708 = vmatmul.mubr.bf16.gmra.mrb[0].mxu0 %v169
  %v709 = vpop.f32.mrb[0].mxu0
  %v710 = vadd.f32 %v670, %v709
  %v711 = vpop.f32.mrb[0].mxu0
  %v712 = vpop.f32.mrb[0].mxu0
  %v713 = vpop.f32.mrb[0].mxu0
  %714 = vdwg.mxu0
  %v715 = vadd.f32 %v154, %v710
  %vm716 = vcmask 64512
  %717 = vst.msk [vmem:[%s3] sm:$0xff] %vm716, %v715
  // Predicated region
  $region18: #{algorithm_forward.1} parent=0 // pred_check
    %p718 = pneg %p15
  $region19: #{algorithm_forward.1} parent=0 // pred_check_branch
    %720 = sbr.rel (%p718) target = $region21
  $region20: #{algorithm_forward.1} parent=0 // pred_region
    %v721 = vld [vmem:[%s3] sm:$0xff]
    %v722 = vld [vmem:[%s2] sm:$0x1]
    %v724 = vlaneseq
    %v725 = vshrl.u32 %v724, 7
    %v726 = vsub.s32 0, %v725
    %v727 = vrot.slane %v722, %v726
    %v729 = vadd.f32 %v721, %v727
    %730 = vst.msk [vmem:[%s3] sm:$0xff] %vm716, %v729
  $region21: #{algorithm_forward.1} parent=0 // pred_fallthru
    _
  // Predicated region
  $region22: #{algorithm_forward.1} parent=0 // pred_check
    _
  $region23: #{algorithm_forward.1} parent=0 // pred_check_branch
    %732 = sbr.rel (0) target = $region25
  $region24: #{algorithm_forward.1} parent=0 // pred_region
    _
  $region25: #{algorithm_forward.1} parent=0 // pred_fallthru
    _
  // Predicated region
  $region26: #{algorithm_forward.1} parent=0 // pred_check
    _
  $region27: #{algorithm_forward.1} parent=0 // pred_check_branch
    %734 = sbr.rel (0) target = $region29
  $region28: #{algorithm_forward.1} parent=0 // pred_region
    _
  $region29: #{algorithm_forward.1} parent=0 // pred_fallthru
    _

</llo_original>
